<compile_context>
chip_gen: v6e
topology: v6e:2x2x1
jax: 0.10.0
libtpu: 0.0.40
codegen_flags: <defaults>
</compile_context>

<pallas_src>
import jax
import jax.numpy as jnp
from jax.experimental import pallas as pl
from jax.experimental.pallas import tpu as pltpu


# ----------------------------- kernel body ---------------------------------
def logreg_kernel(x_ref, w_ref, b_ref, o_ref):
    x = x_ref[...]
    w = w_ref[...]
    # logits = x @ W^T + b ; W^T pre-materialized persistently in w_ref.
    # If weights were prepared as bf16, cast the x tile in-VMEM (no extra HBM
    # traffic); accumulation is forced to f32 either way.
    logits = jnp.dot(x.astype(w.dtype), w,
                     preferred_element_type=jnp.float32) + b_ref[...]
    # Numerically stable softmax over the class axis, all in f32 (v5e-safe).
    m = jnp.max(logits, axis=-1, keepdims=True)
    e = jnp.exp(logits - m)
    denom = jnp.sum(e, axis=-1, keepdims=True)
    o_ref[...] = (e * pl.reciprocal(denom, approx=True)).astype(o_ref.dtype)


# --------------------------- tiling policy ----------------------------------
def _device_kind() -> str:
    try:
        return jax.devices()[0].device_kind.lower()
    except Exception:  # e.g. interpret mode / no device info
        return ""


def _pick_tm(batch: int) -> int:
    """Grid-aware batch tile.

    v7x (2 TensorCores): force >= 2 (even) grid steps so dimension_semantics=
    ("parallel",) actually shards the batch, and minimize batch-pad waste.
    v5e/v6e (1 TC, big VMEM): cap the tile at 1024 rows to amortize the
    ~0.35us per-grid-step overhead.
    """
    kind = _device_kind()
    multi_core = "v7" in kind
    cap = 512 if multi_core else 1024
    steps = pl.cdiv(batch, cap)
    if multi_core:
        steps = max(2, steps)
        steps += steps & 1  # keep the step count even for the two TCs
    tm = -(-batch // steps)              # ceil
    tm = max(8, ((tm + 7) // 8) * 8)     # sublane-aligned
    return min(tm, max(8, ((batch + 7) // 8) * 8))


# --------------------------- parameter prep ---------------------------------
def init_params(weight, bias, *, weight_dtype=None):
    """One-time persistent prep (call once, reuse across forward calls).

    weight: (D_out, D_in) as in nn.Linear; bias: (D_out,).
    Optionally cast the weight to bf16 persistently (halves its VMEM footprint
    and its one-time DMA); bias stays f32 so the softmax math stays f32.
    """
    w_t = weight.T
    if weight_dtype is not None:
        w_t = w_t.astype(weight_dtype)
    b_row = bias.reshape(1, -1).astype(jnp.float32)
    return w_t, b_row


# ----------------------------- forward pass ---------------------------------
def logistic_regression_fwd(x, w_t, b_row):
    """x: (B, D_in); w_t: (D_in, D_out); b_row: (1, D_out). Returns (B, D_out)."""
    B, D_in = x.shape
    assert w_t.shape[0] == D_in
    D_out = w_t.shape[1]

    TM = _pick_tm(B)
    grid_n = pl.cdiv(B, TM)
    B_pad = grid_n * TM

    # Common case: TM divides B -> x goes straight to the kernel, zero copies.
    # Only a ragged remainder triggers a pad (padded rows are sliced off below;
    # zero rows give finite logits, so no NaN risk).
    x_in = x if B_pad == B else jnp.pad(x, ((0, B_pad - B), (0, 0)))

    flops = 2 * B_pad * D_in * D_out
    bytes_accessed = (x_in.size * x_in.dtype.itemsize
                      + w_t.size * w_t.dtype.itemsize
                      + b_row.size * 4
                      + B_pad * D_out * 4)
    cost = pl.CostEstimate(flops=flops,
                           transcendentals=B_pad * D_out,
                           bytes_accessed=bytes_accessed)

    out = pl.pallas_call(
        logreg_kernel,
        out_shape=jax.ShapeDtypeStruct((B_pad, D_out), jnp.float32),
        grid_spec=pltpu.PrefetchScalarGridSpec(
            num_scalar_prefetch=0,
            grid=(grid_n,),
            in_specs=[
                pl.BlockSpec((TM, D_in), lambda i: (i, 0)),     # batch-tiled x
                pl.BlockSpec((D_in, D_out), lambda i: (0, 0)),  # resident W^T
                pl.BlockSpec((1, D_out), lambda i: (0, 0)),     # resident bias
            ],
            # Unpadded (TM, D_out) output blocks: last dim equals the full array
            # dim, so the (8,128) rule is satisfied; 8x fewer HBM output bytes
            # than a 128-lane-padded writeback and no wrapper slicing pass.
            out_specs=pl.BlockSpec((TM, D_out), lambda i: (i, 0)),
        ),
        compiler_params=pltpu.CompilerParams(
            # Batch rows are independent -> parallel (megacore sharding on v7x).
            dimension_semantics=("parallel",),
        ),
        cost_estimate=cost,
    )(x_in, w_t, b_row)

    return out if B_pad == B else out[:B]


def logistic_regression(x, weight, bias, *, weight_dtype=None):
    """Convenience wrapper matching the module signature (prep done per call;
    prefer init_params() + logistic_regression_fwd() for repeated calls)."""
    w_t, b_row = init_params(weight, bias, weight_dtype=weight_dtype)
    return logistic_regression_fwd(x, w_t, b_row)


if __name__ == "__main__":
    # Small shapes consistent with the module: batch=8, input_dim=32, output_dim=16.
    B, D_in, D_out = 8, 32, 16
    key = jax.random.PRNGKey(0)
    kx, kw, kb = jax.random.split(key, 3)

    # Deterministic parameter init mimicking nn.Linear's uniform(-1/sqrt(fan_in), ...)
    bound = 1.0 / (D_in ** 0.5)
    x = jax.random.normal(kx, (B, D_in), dtype=jnp.float32)
    weight = jax.random.uniform(kw, (D_out, D_in), minval=-bound, maxval=bound,
                                dtype=jnp.float32)
    bias = jax.random.uniform(kb, (D_out,), minval=-bound, maxval=bound,
                              dtype=jnp.float32)

    # Persistent parameter prep (done once), then the per-call forward pass.
    w_t, b_row = init_params(weight, bias)
    out = logistic_regression_fwd(x, w_t, b_row)
    out = jax.block_until_ready(out)

    # Reference check against plain JAX (Linear + softmax over last dim).
    # Tolerance accommodates the approx (EUP vrcp) reciprocal in the kernel.
    ref = jax.nn.softmax(x @ weight.T + bias, axis=-1)
    assert out.shape == (B, D_out)
    assert jnp.allclose(out, ref, atol=2e-3, rtol=2e-3)
    assert jnp.allclose(jnp.sum(out, axis=-1), 1.0, atol=2e-3)

    print("KERNEL_OK")
</pallas_src>

<mosaic_0001>
module attributes {stable_mosaic.version = 11 : i64} {
  func.func @logreg_kernel(%arg0: i32, %arg1: memref<8x32xf32, #tpu.memory_space<vmem>>, %arg2: memref<32x16xf32, #tpu.memory_space<vmem>>, %arg3: memref<1x16xf32, #tpu.memory_space<vmem>>, %arg4: memref<8x16xf32, #tpu.memory_space<vmem>>) attributes {dimension_semantics = [#tpu.dimension_semantics<parallel>], iteration_bounds = array<i64: 1>, scalar_prefetch = 0 : i64, scratch_operands = 0 : i64, tpu.core_type = #tpu.core_type<tc>, window_params = [{transform_indices = @transform_0, window_bounds = array<i64: 8, 32>}, {pipeline_mode = #tpu.pipeline_mode<synchronous>, transform_indices = @transform_1, window_bounds = array<i64: 32, 16>}, {pipeline_mode = #tpu.pipeline_mode<synchronous>, transform_indices = @transform_2, window_bounds = array<i64: 1, 16>}, {transform_indices = @transform_3, window_bounds = array<i64: 8, 16>}]} {
    %c0 = arith.constant 0 : index
    %c0_0 = arith.constant 0 : index
    %0 = vector.load %arg1[%c0, %c0_0] : memref<8x32xf32, #tpu.memory_space<vmem>>, vector<8x32xf32>
    %c0_1 = arith.constant 0 : index
    %c0_2 = arith.constant 0 : index
    %1 = vector.load %arg2[%c0_1, %c0_2] : memref<32x16xf32, #tpu.memory_space<vmem>>, vector<32x16xf32>
    %cst = arith.constant dense<0.000000e+00> : vector<8x16xf32>
    %2 = tpu.matmul %0, %1, %cst {dimension_numbers = #tpu.dot_dimension_numbers<[1], [0], [0], [1], [0, 0, 1, 1], [], []>} : vector<8x32xf32>, vector<32x16xf32>, vector<8x16xf32> -> vector<8x16xf32>
    %c0_3 = arith.constant 0 : index
    %c0_4 = arith.constant 0 : index
    %3 = vector.load %arg3[%c0_3, %c0_4] : memref<1x16xf32, #tpu.memory_space<vmem>>, vector<1x16xf32>
    %4 = vector.broadcast %3 : vector<1x16xf32> to vector<8x16xf32>
    %5 = arith.addf %2, %4 : vector<8x16xf32>
    %cst_5 = arith.constant dense<0xFF800000> : vector<8xf32>
    %6 = vector.multi_reduction <maximumf>, %5, %cst_5 [1] : vector<8x16xf32> to vector<8xf32>
    %7 = vector.shape_cast %6 : vector<8xf32> to vector<8x1xf32>
    %8 = vector.broadcast %7 : vector<8x1xf32> to vector<8x16xf32>
    %9 = arith.subf %5, %8 : vector<8x16xf32>
    %10 = math.exp %9 : vector<8x16xf32>
    %cst_6 = arith.constant dense<0.000000e+00> : vector<8xf32>
    %11 = vector.multi_reduction <add>, %10, %cst_6 [1] : vector<8x16xf32> to vector<8xf32>
    %12 = vector.shape_cast %11 : vector<8xf32> to vector<8x1xf32>
    %13 = tpu.reciprocal %12 {approx = true} : vector<8x1xf32> -> vector<8x1xf32>
    %14 = vector.broadcast %13 : vector<8x1xf32> to vector<8x16xf32>
    %15 = arith.mulf %10, %14 : vector<8x16xf32>
    %c0_7 = arith.constant 0 : index
    %c0_8 = arith.constant 0 : index
    %16 = vector.load %arg4[%c0_7, %c0_8] : memref<8x16xf32, #tpu.memory_space<vmem>>, vector<8x16xf32>
    tpu.vector_store %arg4[%c0_7, %c0_8], %15 {strides = array<i32>} : memref<8x16xf32, #tpu.memory_space<vmem>>, vector<8x16xf32>,
    return
  }
  func.func @transform_0(%arg0: i32) -> (i32, i32) {
    %c0_i32 = arith.constant 0 : i32
    %c0_i32_0 = arith.constant 0 : i32
    return %arg0, %c0_i32 : i32, i32
  }
  func.func @transform_1(%arg0: i32) -> (i32, i32) {
    %c0_i32 = arith.constant 0 : i32
    %c0_i32_0 = arith.constant 0 : i32
    %c0_i32_1 = arith.constant 0 : i32
    return %c0_i32, %c0_i32_0 : i32, i32
  }
  func.func @transform_2(%arg0: i32) -> (i32, i32) {
    %c0_i32 = arith.constant 0 : i32
    %c0_i32_0 = arith.constant 0 : i32
    %c0_i32_1 = arith.constant 0 : i32
    return %c0_i32, %c0_i32_0 : i32, i32
  }
  func.func @transform_3(%arg0: i32) -> (i32, i32) {
    %c0_i32 = arith.constant 0 : i32
    %c0_i32_0 = arith.constant 0 : i32
    return %arg0, %c0_i32 : i32, i32
  }
}

</mosaic_0001>

<llo_original>
// kernel: tpu_custom_call.1
$region0: #{tpu_custom_call.1}
  #allocation0 [shape = 'u32[]', space=smem, size = 0x4, offset = 0x4, fixed_abs, tag = 'smem constant byte address 0x4 - core index']
  #allocation1 [shape = 'u32[144,128]{1,0:T(1,128)}', space=vmem, size = 0x12000, scoped, tag = 'internal scratch']
  %s0 = inlined_call_operand.vmem [shape: f32[8,32], index: 0, kind: input, shape index: {}]
  %s1 = inlined_call_operand.vmem [shape: f32[32,16], index: 1, kind: input, shape index: {}]
  %s2 = inlined_call_operand.vmem [shape: f32[1,16], index: 2, kind: input, shape index: {}]
  %s3 = inlined_call_operand.hbm [shape: f32[8,16], index: 3, kind: output, shape index: {}]
  %s4 = sld [smem:[#allocation0]]
  $region22: #{tpu_custom_call.1} parent=0
    _
  %s6 = ssub.s32 1, %s4
  %s7 = scalar_select 0, %s6, %s4
  $region1: #{tpu_custom_call.1} parent=0
    #allocation2 [shape = 'u8[4096]{0}', space=vmem, size = 0x1000, scoped, tag = 'output window, operand 0, single buffered']
    #allocation3 [shape = 's32[1]{0}', space=sflag, size = 0x4, scoped, tag = 'scoped memory for tpu_custom_call.1']
    %8 = vsyncpa [#allocation3], 0
    // Predicated region
    $region2: #{tpu_custom_call.1} parent=1 // pred_check
      _
    $region3: #{tpu_custom_call.1} parent=1 // pred_check_branch
      %10 = sbr.rel (0) target = $region5
    $region4: #{tpu_custom_call.1} parent=1 // pred_region
      _
    $region5: #{tpu_custom_call.1} parent=1 // pred_fallthru
      _
    // Predicated region
    $region6: #{tpu_custom_call.1} parent=1 // pred_check
      _
    $region7: #{tpu_custom_call.1} parent=1 // pred_check_branch
      %12 = sbr.rel (0) target = $region9
    $region8: #{tpu_custom_call.1} parent=1 // pred_region
      _
    $region9: #{tpu_custom_call.1} parent=1 // pred_fallthru
      _
    // Predicated region
    $region10: #{tpu_custom_call.1} parent=1 // pred_check
      _
    $region11: #{tpu_custom_call.1} parent=1 // pred_check_branch
      %14 = sbr.rel (0) target = $region13
    $region12: #{tpu_custom_call.1} parent=1 // pred_region
      _
    $region13: #{tpu_custom_call.1} parent=1 // pred_fallthru
      _
    %v15 = vld [vmem:[%s0] sm:$0xff]
    %v16 = vld [vmem:[%s1] sm:$0xff]
    %v17 = vld [vmem:[%s1 + $0x8] sm:$0xff]
    %v18 = vld [vmem:[%s1 + $0x10] sm:$0xff]
    %v19 = vld [vmem:[%s1 + $0x18] sm:$0xff]
    %v20 = vld [vmem:[%s2] sm:$0x1]
    %v22 = vlaneseq
    %v23 = vshrl.u32 %v22, 7
    %v24 = vsub.s32 0, %v23
    %v25 = vrot.slane %v20, %v24
    %vm27 = vcmask 261120
    %v29 = vsel %vm27, %v15, 0
    %31 = vmatprep.subr.mxu0 0.0
    %32 = vmatpush1.msra.mxu0 0.0
    %33 = vmatprep.subr.mxu0 0.0
    %34 = vmatpush1.msra.mxu0 0.0
    %35 = vmatprep.subr.mxu0 0.0
    %36 = vmatpush1.msra.mxu0 0.0
    %37 = vmatprep.subr.mxu0 0.0
    %38 = vmatpush1.msra.mxu0 0.0
    %39 = vmatprep.subr.mxu0 0.0
    %40 = vmatpush1.msra.mxu0 0.0
    %41 = vmatprep.subr.mxu0 0.0
    %42 = vmatpush1.msra.mxu0 0.0
    %43 = vmatprep.subr.mxu0 0.0
    %44 = vmatpush1.msra.mxu0 0.0
    %45 = vmatprep.subr.mxu0 0.0
    %46 = vmatpush1.msra.mxu0 0.0
    %47 = vmatprep.subr.mxu0 0.0
    %48 = vmatpush1.msra.mxu0 0.0
    %49 = vmatprep.subr.mxu0 0.0
    %50 = vmatpush1.msra.mxu0 0.0
    %51 = vmatprep.subr.mxu0 0.0
    %52 = vmatpush1.msra.mxu0 0.0
    %53 = vmatprep.subr.mxu0 0.0
    %54 = vmatpush1.msra.mxu0 0.0
    %55 = vmatprep.subr.mxu0 0.0
    %56 = vmatpush1.msra.mxu0 %v19
    %57 = vmatprep.subr.mxu0 0.0
    %58 = vmatpush1.msra.mxu0 %v18
    %59 = vmatprep.subr.mxu0 0.0
    %60 = vmatpush1.msra.mxu0 %v17
    %61 = vmatprep.subr.mxu0 0.0
    %62 = vmatpush1.msra.mxu0 %v16
    %63 = vmatprep.subr.mxu0 0.0
    %64 = vmatpush2.msra.mxu0 0.0
    %65 = vmatprep.subr.mxu0 0.0
    %66 = vmatpush2.msra.mxu0 0.0
    %67 = vmatprep.subr.mxu0 0.0
    %68 = vmatpush2.msra.mxu0 0.0
    %69 = vmatprep.subr.mxu0 0.0
    %70 = vmatpush2.msra.mxu0 0.0
    %71 = vmatprep.subr.mxu0 0.0
    %72 = vmatpush2.msra.mxu0 0.0
    %73 = vmatprep.subr.mxu0 0.0
    %74 = vmatpush2.msra.mxu0 0.0
    %75 = vmatprep.subr.mxu0 0.0
    %76 = vmatpush2.msra.mxu0 0.0
    %77 = vmatprep.subr.mxu0 0.0
    %78 = vmatpush2.msra.mxu0 0.0
    %79 = vmatprep.subr.mxu0 0.0
    %80 = vmatpush2.msra.mxu0 0.0
    %81 = vmatprep.subr.mxu0 0.0
    %82 = vmatpush2.msra.mxu0 0.0
    %83 = vmatprep.subr.mxu0 0.0
    %84 = vmatpush2.msra.mxu0 0.0
    %85 = vmatprep.subr.mxu0 0.0
    %86 = vmatpush2.msra.mxu0 0.0
    %87 = vmatprep.subr.mxu0 0.0
    %88 = vmatpush2.msra.mxu0 0.0
    %89 = vmatprep.subr.mxu0 0.0
    %90 = vmatpush2.msra.mxu0 0.0
    %91 = vmatprep.subr.mxu0 0.0
    %92 = vmatpush2.msra.mxu0 0.0
    %93 = vmatprep.subr.mxu0 0.0
    %94 = vmatpush2.msra.mxu0 0.0
    %95 = vmatprep.mubr.f32.mxu0 0.0
    %96 = vmatmul.mubr.f32.gmra.mxu0 %v29
    %v97 = vpop.f32.mrf.mxu0
    %v98 = vadd.f32 %v25, %v97
    %v99 = vpop.f32.mrf.mxu0
    %100 = vdwg.mxu0
    %vm101 = vcmask 130048
    %v102 = vsel %vm101, %v98, -inf
    %103 = vmax.xlane.f32.xlu0 %v102
    %v104 = vpop.xlane.xlu0 %103
    %v105 = vsub.f32 %v98, %v104
    %v106 = vmul.f32 %v105, 1.442695
    %v107 = vpow.pop %v106
    %v108 = vsel %vm101, %v107, 0.0
    %109 = vadd.xlane.f32.xlu0 %v108
    %v110 = vpop.xlane.xlu0 %109
    %v111 = vrcp.pop %v110
    %v112 = vmul.f32 %v107, %v111
    %113 = vst.msk [vmem:[#allocation2] sm:$0xff] %vm101, %v112
    // Predicated region
    $region14: #{tpu_custom_call.1} parent=1 // pred_check
      _
    $region15: #{tpu_custom_call.1} parent=1 // pred_check_branch
      %115 = sbr.rel (0) target = $region17
    $region16: #{tpu_custom_call.1} parent=1 // pred_region
      %s117 = ssub.s32 128, 128
      %118 = vsyncadd [#allocation3], %s117
      %s120 = sshll.u32 [#allocation2], 4
      %s121 = int_to_ptr.vmem [resolvable:$true] %s120
      %123 = dma.vmem_to_hbm [thread:$0]  %s121, 128, %s3, [#allocation3]
    $region17: #{tpu_custom_call.1} parent=1 // pred_fallthru
      _
    // Predicated region
    $region18: #{tpu_custom_call.1} parent=1 // pred_check
      _
    $region19: #{tpu_custom_call.1} parent=1 // pred_check_branch
      %125 = sbr.rel (0) target = $region21
    $region20: #{tpu_custom_call.1} parent=1 // pred_region
      %126 = dma.done [#allocation3], 128
    $region21: #{tpu_custom_call.1} parent=1 // pred_fallthru
      _
    %127 = vsyncpa [#allocation3], 1

</llo_original>
